<compile_context>
chip_gen: v5e
topology: v5e:2x2
jax: 0.10.0
libtpu: 0.0.40
codegen_flags: <defaults>
</compile_context>

<pallas_src>
import math
import jax
import jax.numpy as jnp
import numpy as np
from jax.experimental import pallas as pl
from jax.experimental.pallas import tpu as pltpu

# ---------------- small config consistent with the module ----------------
D_IN = 16          # tabular feature dim (d_in == d_out of the diffusion net)
DIM_T = 64         # module default is 256; kept small for the test
D_MAIN = 32
D_HIDDEN = 64
N_BLOCKS = 2
NUM_CLASSES = 4
BATCH = 8
BN_EPS = 1e-5

LANES = 128
W_BLOCK = 128                       # one weight block = 128 rows x 128 lanes (bf16)
W2L_OFF = W_BLOCK                   # fused [wt2 ; label_emb] block (256 rows)
WFM_OFF = W2L_OFF + 2 * W_BLOCK     # fused [wf ; wm] block (256 rows)
BLK0_OFF = WFM_OFF + 2 * W_BLOCK    # first residual block weights
HEAD_OFF = BLK0_OFF + 2 * W_BLOCK * N_BLOCKS
N_W_ROWS = HEAD_OFF + W_BLOCK       # = 1280 rows for N_BLOCKS=2
N_V_ROWS = 16                       # 12 used vector rows, padded to a multiple of 8


def forward_kernel(din_ref, wslab_ref, vslab_ref, out_ref):
    """Fused forward.
       din_ref  : [B, 128]  f32  (lanes 0:16 = x, lane 16 = t, lane 17 = y, rest 0)
       wslab_ref: [1280,128] bf16 packed, zero-padded weight blocks
       vslab_ref: [16, 128]  f32  packed freqs/phase/biases/BN params
       out_ref  : [B, 128]   f32  lane-dense output (valid lanes 0:D_IN)
    """
    f32 = jnp.float32
    bf16 = jnp.bfloat16
    B = din_ref.shape[0]

    def vrow(i):                       # [1,128] f32 parameter row (each used once)
        return vslab_ref[i:i + 1, :]

    def wblk(r0, rows=W_BLOCK):        # [rows,128] bf16 weight block
        return wslab_ref[r0:r0 + rows, :]

    def silu(v):
        # sigmoid(v) = 0.5*(tanh(v/2)+1): keeps the transcendental on the EUP slot,
        # evaluated in f32 BEFORE any bf16 cast (v5e VPU/EUP have no bf16).
        return v * (0.5 * jnp.tanh(0.5 * v) + 0.5)

    def bn_hat(v):
        # Training-mode BatchNorm1d statistics with a SINGLE cross-sublane reduction:
        # pack v (lanes 0:D_MAIN) and v*v (lanes D_MAIN:2*D_MAIN) into one [B,128]
        # array, reduce once, then roll E[v^2] back into alignment with the mean.
        # v always carries zero padding in lanes D_MAIN:128 (invariant of the packing).
        packed = v + pltpu.roll(v * v, D_MAIN, 1)
        mom = jnp.mean(packed, axis=0, keepdims=True)          # [1,128]: mean | E[v^2] | 0
        mean = jnp.broadcast_to(mom, v.shape)                  # broadcast once, reuse
        ex2 = pltpu.roll(mean, LANES - D_MAIN, 1)              # E[v^2] aligned to lanes 0:D_MAIN
        var = jnp.maximum(ex2 - mean * mean, 0.0)              # clamp keeps padding lanes finite
        return (v - mean) * jax.lax.rsqrt(var + BN_EPS)

    x128 = din_ref[...]                          # [B,128] input slab
    t_col = x128[:, D_IN:D_IN + 1]               # [B,1] timestep (broadcast in-kernel)
    y_col = x128[:, D_IN + 1:D_IN + 2]           # [B,1] class id as f32

    # --- sinusoidal timestep embedding, no lane concat: cos(t*f + phase) ---
    # Padding lanes DIM_T:128 evaluate to cos(0)=1; this is harmless ONLY because
    # wt1's padded rows are zero (invariant enforced by pack_params.pad_block).
    emb = jnp.cos(t_col * vrow(0) + vrow(1))     # [B,128] (valid lanes 0:DIM_T)

    # --- time_embed first Linear (bf16 operands, f32 accumulate) ---
    h = jnp.dot(emb.astype(bf16), wblk(0), preferred_element_type=f32) + vrow(2)

    # --- fused: time_embed second Linear + label-embedding gather (one K=256 matmul) ---
    lane = jax.lax.broadcasted_iota(jnp.int32, (B, LANES), 1)
    onehot = jnp.where(lane == y_col.astype(jnp.int32), 1.0, 0.0)
    xa2 = jnp.concatenate([silu(h), onehot], axis=-1).astype(bf16)   # [B,256]
    emb = jnp.dot(xa2, wblk(W2L_OFF, 256), preferred_element_type=f32) + vrow(3)

    # --- fused entry: first_layer(x) + mlp(SiLU(emb)) as one K=256 matmul ---
    # Lanes 16/17 of x128 carry t/y but rows 16:128 of the wfm block are zero.
    xa = jnp.concatenate([x128, silu(emb)], axis=-1).astype(bf16)    # [B,256]
    x = jnp.dot(xa, wblk(WFM_OFF, 256), preferred_element_type=f32) + vrow(4)

    # --- residual blocks: BN (affine folded into w1/b1) -> Linear -> ReLU -> Linear -> +skip ---
    for i in range(N_BLOCKS):
        w1_off = BLK0_OFF + 2 * W_BLOCK * i
        xh = bn_hat(x)
        z = jnp.dot(xh.astype(bf16), wblk(w1_off), preferred_element_type=f32) + vrow(5 + 2 * i)
        z = jnp.maximum(z, 0.0)
        z = jnp.dot(z.astype(bf16), wblk(w1_off + W_BLOCK), preferred_element_type=f32) + vrow(6 + 2 * i)
        x = x + z

    # --- head: BN (affine kept: ReLU sits between BN and Linear) -> ReLU -> Linear ---
    gh_row = 5 + 2 * N_BLOCKS
    xh = bn_hat(x) * vrow(gh_row) + vrow(gh_row + 1)
    xh = jnp.maximum(xh, 0.0)
    out_ref[...] = (jnp.dot(xh.astype(bf16), wblk(HEAD_OFF), preferred_element_type=f32)
                    + vrow(gh_row + 2))


# ---------------- parameter init (deterministic, PyTorch-Linear-like) ----------------
def _linear_params(key, d_in, d_out):
    k1, k2 = jax.random.split(key)
    bound = 1.0 / math.sqrt(d_in)
    w = jax.random.uniform(k1, (d_in, d_out), jnp.float32, -bound, bound)  # [in, out]
    b = jax.random.uniform(k2, (1, d_out), jnp.float32, -bound, bound)
    return w, b


def init_params(key):
    keys = jax.random.split(key, 8 + N_BLOCKS)
    p = {}
    p["wt1"], p["bt1"] = _linear_params(keys[0], DIM_T, DIM_T)
    p["wt2"], p["bt2"] = _linear_params(keys[1], DIM_T, DIM_T)
    p["label_emb"] = jax.random.normal(keys[2], (NUM_CLASSES, DIM_T), jnp.float32)
    p["wf"], p["bf"] = _linear_params(keys[3], D_IN, D_MAIN)
    p["wm"], p["bm"] = _linear_params(keys[4], DIM_T, D_MAIN)
    p["blocks"] = []
    for i in range(N_BLOCKS):
        kk = jax.random.split(keys[5 + i], 2)
        gamma = jnp.ones((1, D_MAIN), jnp.float32)
        beta = jnp.zeros((1, D_MAIN), jnp.float32)
        w1, b1 = _linear_params(kk[0], D_MAIN, D_HIDDEN)
        w2, b2 = _linear_params(kk[1], D_HIDDEN, D_MAIN)
        p["blocks"].append((gamma, beta, w1, b1, w2, b2))
    p["gh"] = jnp.ones((1, D_MAIN), jnp.float32)
    p["bh"] = jnp.zeros((1, D_MAIN), jnp.float32)
    p["wh"], p["bhd"] = _linear_params(keys[5 + N_BLOCKS], D_MAIN, D_IN)
    return p


# ---------------- host-side packing into two DMA slabs (done once) ----------------
def pack_params(params):
    def pad_block(w, rows):
        out = jnp.zeros((rows, LANES), jnp.float32)     # zero padding is a kernel invariant
        return out.at[:w.shape[0], :w.shape[1]].set(w)

    wblocks = [pad_block(params["wt1"], W_BLOCK)]
    # fused time_embed-second-Linear + label embedding: rows 0:DIM_T = wt2,
    # rows 128:128+NUM_CLASSES = label_emb  (bias = bt2, kept in vslab)
    w2l = jnp.zeros((2 * W_BLOCK, LANES), jnp.float32)
    w2l = w2l.at[:DIM_T, :DIM_T].set(params["wt2"])
    w2l = w2l.at[W_BLOCK:W_BLOCK + NUM_CLASSES, :DIM_T].set(params["label_emb"])
    wblocks.append(w2l)
    # fused first_layer + mlp weight: rows 0:D_IN = wf, rows 128:128+DIM_T = wm
    wfm = jnp.zeros((2 * W_BLOCK, LANES), jnp.float32)
    wfm = wfm.at[:D_IN, :D_MAIN].set(params["wf"])
    wfm = wfm.at[W_BLOCK:W_BLOCK + DIM_T, :D_MAIN].set(params["wm"])
    wblocks.append(wfm)
    for (g, b, w1, b1, w2, b2) in params["blocks"]:
        wblocks.append(pad_block(g.reshape(-1, 1) * w1, W_BLOCK))   # fold BN gamma into w1
        wblocks.append(pad_block(w2, W_BLOCK))
    wblocks.append(pad_block(params["wh"], W_BLOCK))
    wslab = jnp.concatenate(wblocks, axis=0).astype(jnp.bfloat16)   # [1280,128] bf16
    assert wslab.shape == (N_W_ROWS, LANES)

    half = DIM_T // 2
    freqs = jnp.exp(-math.log(10000.0) * jnp.arange(half, dtype=jnp.float32) / half)
    freqs_full = (jnp.zeros((LANES,), jnp.float32)
                  .at[:half].set(freqs).at[half:DIM_T].set(freqs))
    phase = jnp.zeros((LANES,), jnp.float32).at[half:DIM_T].set(-math.pi / 2.0)

    def vrow(v):
        r = jnp.zeros((LANES,), jnp.float32)
        return r.at[:v.reshape(-1).shape[0]].set(v.reshape(-1))

    vrows = [freqs_full, phase,
             vrow(params["bt1"]), vrow(params["bt2"]),
             vrow(params["bf"] + params["bm"])]
    for (g, b, w1, b1, w2, b2) in params["blocks"]:
        vrows.append(vrow(b1 + b @ w1))              # fold BN beta into b1
        vrows.append(vrow(b2))
    vrows.append(vrow(params["gh"]))
    vrows.append(vrow(params["bh"]))
    vrows.append(vrow(params["bhd"]))
    while len(vrows) < N_V_ROWS:
        vrows.append(jnp.zeros((LANES,), jnp.float32))
    vslab = jnp.stack(vrows, axis=0)                 # [16,128] f32
    return {"wslab": wslab, "vslab": vslab}


# ---------------- wrapper ----------------
@jax.jit
def resnet_diffusion_forward(packed, x, timesteps, y):
    B = x.shape[0]
    ts = timesteps.reshape(-1).astype(jnp.float32)
    yv = y.reshape(-1).astype(jnp.float32)
    # single lane-aligned per-example slab, built with ONE concatenate HLO:
    # lanes 0:16 = x, lane 16 = t, lane 17 = y, lanes 18:128 = 0
    din = jnp.concatenate(
        [x.astype(jnp.float32), ts[:, None], yv[:, None],
         jnp.zeros((B, LANES - D_IN - 2), jnp.float32)], axis=-1)

    vmem = pl.BlockSpec(memory_space=pltpu.MemorySpace.VMEM)
    out = pl.pallas_call(
        forward_kernel,
        out_shape=jax.ShapeDtypeStruct((B, LANES), jnp.float32),
        in_specs=[vmem, vmem, vmem],
        out_specs=vmem,
    )(din, packed["wslab"], packed["vslab"])
    # TODO(synk): in a diffusion sampling loop wslab/vslab are identical every step; keep
    #             them VMEM-resident (pltpu.with_memory_space_constraint or a constant-index
    #             grid axis) instead of re-DMAing ~320 KiB per call.
    # TODO(synk): for large-batch sampling, add a "parallel" batch grid axis with two-pass
    #             BN stats (scratch accumulate + pl.when finalize) so both v7x TensorCores
    #             are used; size the batch tile for v7x's 32 MiB scoped VMEM.
    return out[:, :D_IN]                             # lane-dense store, slice in wrapper


# ---------------- pure-JAX reference (true f32 module semantics) ----------------
def reference_forward(params, x, timesteps, y):
    half = DIM_T // 2
    freqs = jnp.exp(-math.log(10000.0) * jnp.arange(half, dtype=jnp.float32) / half)
    ts = timesteps.reshape(-1).astype(jnp.float32)
    args = ts[:, None] * freqs[None, :]
    emb = jnp.concatenate([jnp.cos(args), jnp.sin(args)], axis=-1)

    def silu(v):
        return v * jax.nn.sigmoid(v)

    h = emb @ params["wt1"] + params["bt1"]
    emb = silu(h) @ params["wt2"] + params["bt2"]
    emb = emb + params["label_emb"][y.reshape(-1)]
    xx = x.astype(jnp.float32) @ params["wf"] + params["bf"]
    xx = xx + silu(emb) @ params["wm"] + params["bm"]
    for (g, b, w1, b1, w2, b2) in params["blocks"]:
        mean = xx.mean(0, keepdims=True)
        var = ((xx - mean) ** 2).mean(0, keepdims=True)
        z = (xx - mean) / jnp.sqrt(var + BN_EPS) * g + b
        z = jnp.maximum(z @ w1 + b1, 0.0) @ w2 + b2
        xx = xx + z
    mean = xx.mean(0, keepdims=True)
    var = ((xx - mean) ** 2).mean(0, keepdims=True)
    z = (xx - mean) / jnp.sqrt(var + BN_EPS) * params["gh"] + params["bh"]
    z = jnp.maximum(z, 0.0)
    return z @ params["wh"] + params["bhd"]


if __name__ == "__main__":
    key = jax.random.PRNGKey(0)
    kp, kx, kt, ky = jax.random.split(key, 4)
    params = init_params(kp)
    packed = pack_params(params)

    x = jax.random.normal(kx, (BATCH, D_IN), jnp.float32)
    timesteps = jax.random.randint(kt, (BATCH,), 0, 1000).astype(jnp.int32)
    y = jax.random.randint(ky, (BATCH,), 0, NUM_CLASSES).astype(jnp.int32)

    out = resnet_diffusion_forward(packed, x, timesteps, y)
    out = jax.block_until_ready(out)

    ref = reference_forward(params, x, timesteps, y)
    assert out.shape == (BATCH, D_IN)
    max_err = float(jnp.max(jnp.abs(out - ref)))
    # bf16 matmul operands (f32 accumulation) vs. the pure-f32 reference -> tolerance 3e-2
    assert np.isfinite(max_err) and max_err < 3e-2, f"mismatch: {max_err}"
    print("KERNEL_OK")
</pallas_src>

<mosaic_0001>
module attributes {stable_mosaic.version = 11 : i64} {
  func.func @forward_kernel(%arg0: memref<8x128xf32, #tpu.memory_space<vmem>>, %arg1: memref<1280x128xbf16, #tpu.memory_space<vmem>>, %arg2: memref<16x128xf32, #tpu.memory_space<vmem>>, %arg3: memref<8x128xf32, #tpu.memory_space<vmem>>) attributes {dimension_semantics = [], scalar_prefetch = 0 : i64, scratch_operands = 0 : i64, tpu.core_type = #tpu.core_type<tc>} {
    %c0 = arith.constant 0 : index
    %c0_0 = arith.constant 0 : index
    %0 = vector.load %arg0[%c0, %c0_0] : memref<8x128xf32, #tpu.memory_space<vmem>>, vector<8x128xf32>
    %1 = vector.extract_strided_slice %0 {offsets = [0, 16], sizes = [8, 1], strides = [1, 1]} : vector<8x128xf32> to vector<8x1xf32>
    %2 = vector.extract_strided_slice %0 {offsets = [0, 17], sizes = [8, 1], strides = [1, 1]} : vector<8x128xf32> to vector<8x1xf32>
    %c0_1 = arith.constant 0 : index
    %c0_2 = arith.constant 0 : index
    %3 = vector.load %arg2[%c0_1, %c0_2] : memref<16x128xf32, #tpu.memory_space<vmem>>, vector<1x128xf32>
    %4 = vector.broadcast %1 : vector<8x1xf32> to vector<8x128xf32>
    %5 = vector.broadcast %3 : vector<1x128xf32> to vector<8x128xf32>
    %6 = arith.mulf %4, %5 : vector<8x128xf32>
    %c1 = arith.constant 1 : index
    %c0_3 = arith.constant 0 : index
    %7 = vector.load %arg2[%c1, %c0_3] : memref<16x128xf32, #tpu.memory_space<vmem>>, vector<1x128xf32>
    %8 = vector.broadcast %7 : vector<1x128xf32> to vector<8x128xf32>
    %9 = arith.addf %6, %8 : vector<8x128xf32>
    %10 = math.cos %9 : vector<8x128xf32>
    %11 = arith.truncf %10 : vector<8x128xf32> to vector<8x128xbf16>
    %c0_4 = arith.constant 0 : index
    %c0_5 = arith.constant 0 : index
    %12 = vector.load %arg1[%c0_4, %c0_5] : memref<1280x128xbf16, #tpu.memory_space<vmem>>, vector<128x128xbf16>
    %cst = arith.constant dense<0.000000e+00> : vector<8x128xf32>
    %13 = tpu.matmul %11, %12, %cst {dimension_numbers = #tpu.dot_dimension_numbers<[1], [0], [0], [1], [0, 0, 1, 1], [], []>} : vector<8x128xbf16>, vector<128x128xbf16>, vector<8x128xf32> -> vector<8x128xf32>
    %c2 = arith.constant 2 : index
    %c0_6 = arith.constant 0 : index
    %14 = vector.load %arg2[%c2, %c0_6] : memref<16x128xf32, #tpu.memory_space<vmem>>, vector<1x128xf32>
    %15 = vector.broadcast %14 : vector<1x128xf32> to vector<8x128xf32>
    %16 = arith.addf %13, %15 : vector<8x128xf32>
    %17 = tpu.iota {dimensions = array<i32: 1>} : vector<8x128xi32>
    %18 = arith.fptosi %2 : vector<8x1xf32> to vector<8x1xi32>
    %19 = vector.broadcast %18 : vector<8x1xi32> to vector<8x128xi32>
    %20 = arith.cmpi eq, %17, %19 : vector<8x128xi32>
    %cst_7 = arith.constant 1.000000e+00 : f32
    %cst_8 = arith.constant 0.000000e+00 : f32
    %21 = vector.broadcast %cst_7 : f32 to vector<8x128xf32>
    %22 = vector.broadcast %cst_8 : f32 to vector<8x128xf32>
    %23 = arith.select %20, %21, %22 : vector<8x128xi1>, vector<8x128xf32>
    %cst_9 = arith.constant 5.000000e-01 : f32
    %24 = vector.broadcast %cst_9 : f32 to vector<8x128xf32>
    %25 = arith.mulf %24, %16 : vector<8x128xf32>
    %26 = math.tanh %25 : vector<8x128xf32>
    %cst_10 = arith.constant 5.000000e-01 : f32
    %27 = vector.broadcast %cst_10 : f32 to vector<8x128xf32>
    %28 = arith.mulf %27, %26 : vector<8x128xf32>
    %cst_11 = arith.constant 5.000000e-01 : f32
    %29 = vector.broadcast %cst_11 : f32 to vector<8x128xf32>
    %30 = arith.addf %28, %29 : vector<8x128xf32>
    %31 = arith.mulf %16, %30 : vector<8x128xf32>
    %32 = tpu.concatenate %31, %23 in 1 : vector<8x128xf32>, vector<8x128xf32> -> vector<8x256xf32>
    %33 = arith.truncf %32 : vector<8x256xf32> to vector<8x256xbf16>
    %c128 = arith.constant 128 : index
    %c0_12 = arith.constant 0 : index
    %34 = vector.load %arg1[%c128, %c0_12] : memref<1280x128xbf16, #tpu.memory_space<vmem>>, vector<256x128xbf16>
    %cst_13 = arith.constant dense<0.000000e+00> : vector<8x128xf32>
    %35 = tpu.matmul %33, %34, %cst_13 {dimension_numbers = #tpu.dot_dimension_numbers<[1], [0], [0], [1], [0, 0, 1, 1], [], []>} : vector<8x256xbf16>, vector<256x128xbf16>, vector<8x128xf32> -> vector<8x128xf32>
    %c3 = arith.constant 3 : index
    %c0_14 = arith.constant 0 : index
    %36 = vector.load %arg2[%c3, %c0_14] : memref<16x128xf32, #tpu.memory_space<vmem>>, vector<1x128xf32>
    %37 = vector.broadcast %36 : vector<1x128xf32> to vector<8x128xf32>
    %38 = arith.addf %35, %37 : vector<8x128xf32>
    %cst_15 = arith.constant 5.000000e-01 : f32
    %39 = vector.broadcast %cst_15 : f32 to vector<8x128xf32>
    %40 = arith.mulf %39, %38 : vector<8x128xf32>
    %41 = math.tanh %40 : vector<8x128xf32>
    %cst_16 = arith.constant 5.000000e-01 : f32
    %42 = vector.broadcast %cst_16 : f32 to vector<8x128xf32>
    %43 = arith.mulf %42, %41 : vector<8x128xf32>
    %cst_17 = arith.constant 5.000000e-01 : f32
    %44 = vector.broadcast %cst_17 : f32 to vector<8x128xf32>
    %45 = arith.addf %43, %44 : vector<8x128xf32>
    %46 = arith.mulf %38, %45 : vector<8x128xf32>
    %47 = tpu.concatenate %0, %46 in 1 : vector<8x128xf32>, vector<8x128xf32> -> vector<8x256xf32>
    %48 = arith.truncf %47 : vector<8x256xf32> to vector<8x256xbf16>
    %c384 = arith.constant 384 : index
    %c0_18 = arith.constant 0 : index
    %49 = vector.load %arg1[%c384, %c0_18] : memref<1280x128xbf16, #tpu.memory_space<vmem>>, vector<256x128xbf16>
    %cst_19 = arith.constant dense<0.000000e+00> : vector<8x128xf32>
    %50 = tpu.matmul %48, %49, %cst_19 {dimension_numbers = #tpu.dot_dimension_numbers<[1], [0], [0], [1], [0, 0, 1, 1], [], []>} : vector<8x256xbf16>, vector<256x128xbf16>, vector<8x128xf32> -> vector<8x128xf32>
    %c4 = arith.constant 4 : index
    %c0_20 = arith.constant 0 : index
    %51 = vector.load %arg2[%c4, %c0_20] : memref<16x128xf32, #tpu.memory_space<vmem>>, vector<1x128xf32>
    %52 = vector.broadcast %51 : vector<1x128xf32> to vector<8x128xf32>
    %53 = arith.addf %50, %52 : vector<8x128xf32>
    %54 = arith.mulf %53, %53 : vector<8x128xf32>
    %c32_i32 = arith.constant 32 : i32
    %55 = tpu.dynamic_rotate %54 by %c32_i32 dim 1 : vector<8x128xf32>, i32 -> vector<8x128xf32>
    %56 = arith.addf %53, %55 : vector<8x128xf32>
    %cst_21 = arith.constant dense<0.000000e+00> : vector<128xf32>
    %57 = vector.multi_reduction <add>, %56, %cst_21 [0] : vector<8x128xf32> to vector<128xf32>
    %58 = vector.shape_cast %57 : vector<128xf32> to vector<1x128xf32>
    %cst_22 = arith.constant 8.000000e+00 : f32
    %59 = vector.broadcast %cst_22 : f32 to vector<1x128xf32>
    %60 = arith.divf %58, %59 : vector<1x128xf32>
    %61 = vector.shape_cast %60 : vector<1x128xf32> to vector<1x128xf32>
    %62 = vector.broadcast %61 : vector<1x128xf32> to vector<8x128xf32>
    %c96_i32 = arith.constant 96 : i32
    %63 = tpu.dynamic_rotate %62 by %c96_i32 dim 1 : vector<8x128xf32>, i32 -> vector<8x128xf32>
    %64 = arith.mulf %62, %62 : vector<8x128xf32>
    %65 = arith.subf %63, %64 : vector<8x128xf32>
    %cst_23 = arith.constant 0.000000e+00 : f32
    %66 = vector.broadcast %cst_23 : f32 to vector<8x128xf32>
    %67 = arith.maximumf %65, %66 : vector<8x128xf32>
    %68 = arith.subf %53, %62 : vector<8x128xf32>
    %cst_24 = arith.constant 9.99999974E-6 : f32
    %69 = vector.broadcast %cst_24 : f32 to vector<8x128xf32>
    %70 = arith.addf %67, %69 : vector<8x128xf32>
    %71 = math.rsqrt %70 : vector<8x128xf32>
    %72 = arith.mulf %68, %71 : vector<8x128xf32>
    %73 = arith.truncf %72 : vector<8x128xf32> to vector<8x128xbf16>
    %c640 = arith.constant 640 : index
    %c0_25 = arith.constant 0 : index
    %74 = vector.load %arg1[%c640, %c0_25] : memref<1280x128xbf16, #tpu.memory_space<vmem>>, vector<128x128xbf16>
    %cst_26 = arith.constant dense<0.000000e+00> : vector<8x128xf32>
    %75 = tpu.matmul %73, %74, %cst_26 {dimension_numbers = #tpu.dot_dimension_numbers<[1], [0], [0], [1], [0, 0, 1, 1], [], []>} : vector<8x128xbf16>, vector<128x128xbf16>, vector<8x128xf32> -> vector<8x128xf32>
    %c5 = arith.constant 5 : index
    %c0_27 = arith.constant 0 : index
    %76 = vector.load %arg2[%c5, %c0_27] : memref<16x128xf32, #tpu.memory_space<vmem>>, vector<1x128xf32>
    %77 = vector.broadcast %76 : vector<1x128xf32> to vector<8x128xf32>
    %78 = arith.addf %75, %77 : vector<8x128xf32>
    %cst_28 = arith.constant 0.000000e+00 : f32
    %79 = vector.broadcast %cst_28 : f32 to vector<8x128xf32>
    %80 = arith.maximumf %78, %79 : vector<8x128xf32>
    %81 = arith.truncf %80 : vector<8x128xf32> to vector<8x128xbf16>
    %c768 = arith.constant 768 : index
    %c0_29 = arith.constant 0 : index
    %82 = vector.load %arg1[%c768, %c0_29] : memref<1280x128xbf16, #tpu.memory_space<vmem>>, vector<128x128xbf16>
    %cst_30 = arith.constant dense<0.000000e+00> : vector<8x128xf32>
    %83 = tpu.matmul %81, %82, %cst_30 {dimension_numbers = #tpu.dot_dimension_numbers<[1], [0], [0], [1], [0, 0, 1, 1], [], []>} : vector<8x128xbf16>, vector<128x128xbf16>, vector<8x128xf32> -> vector<8x128xf32>
    %c6 = arith.constant 6 : index
    %c0_31 = arith.constant 0 : index
    %84 = vector.load %arg2[%c6, %c0_31] : memref<16x128xf32, #tpu.memory_space<vmem>>, vector<1x128xf32>
    %85 = vector.broadcast %84 : vector<1x128xf32> to vector<8x128xf32>
    %86 = arith.addf %83, %85 : vector<8x128xf32>
    %87 = arith.addf %53, %86 : vector<8x128xf32>
    %88 = arith.mulf %87, %87 : vector<8x128xf32>
    %c32_i32_32 = arith.constant 32 : i32
    %89 = tpu.dynamic_rotate %88 by %c32_i32_32 dim 1 : vector<8x128xf32>, i32 -> vector<8x128xf32>
    %90 = arith.addf %87, %89 : vector<8x128xf32>
    %cst_33 = arith.constant dense<0.000000e+00> : vector<128xf32>
    %91 = vector.multi_reduction <add>, %90, %cst_33 [0] : vector<8x128xf32> to vector<128xf32>
    %92 = vector.shape_cast %91 : vector<128xf32> to vector<1x128xf32>
    %cst_34 = arith.constant 8.000000e+00 : f32
    %93 = vector.broadcast %cst_34 : f32 to vector<1x128xf32>
    %94 = arith.divf %92, %93 : vector<1x128xf32>
    %95 = vector.shape_cast %94 : vector<1x128xf32> to vector<1x128xf32>
    %96 = vector.broadcast %95 : vector<1x128xf32> to vector<8x128xf32>
    %c96_i32_35 = arith.constant 96 : i32
    %97 = tpu.dynamic_rotate %96 by %c96_i32_35 dim 1 : vector<8x128xf32>, i32 -> vector<8x128xf32>
    %98 = arith.mulf %96, %96 : vector<8x128xf32>
    %99 = arith.subf %97, %98 : vector<8x128xf32>
    %cst_36 = arith.constant 0.000000e+00 : f32
    %100 = vector.broadcast %cst_36 : f32 to vector<8x128xf32>
    %101 = arith.maximumf %99, %100 : vector<8x128xf32>
    %102 = arith.subf %87, %96 : vector<8x128xf32>
    %cst_37 = arith.constant 9.99999974E-6 : f32
    %103 = vector.broadcast %cst_37 : f32 to vector<8x128xf32>
    %104 = arith.addf %101, %103 : vector<8x128xf32>
    %105 = math.rsqrt %104 : vector<8x128xf32>
    %106 = arith.mulf %102, %105 : vector<8x128xf32>
    %107 = arith.truncf %106 : vector<8x128xf32> to vector<8x128xbf16>
    %c896 = arith.constant 896 : index
    %c0_38 = arith.constant 0 : index
    %108 = vector.load %arg1[%c896, %c0_38] : memref<1280x128xbf16, #tpu.memory_space<vmem>>, vector<128x128xbf16>
    %cst_39 = arith.constant dense<0.000000e+00> : vector<8x128xf32>
    %109 = tpu.matmul %107, %108, %cst_39 {dimension_numbers = #tpu.dot_dimension_numbers<[1], [0], [0], [1], [0, 0, 1, 1], [], []>} : vector<8x128xbf16>, vector<128x128xbf16>, vector<8x128xf32> -> vector<8x128xf32>
    %c7 = arith.constant 7 : index
    %c0_40 = arith.constant 0 : index
    %110 = vector.load %arg2[%c7, %c0_40] : memref<16x128xf32, #tpu.memory_space<vmem>>, vector<1x128xf32>
    %111 = vector.broadcast %110 : vector<1x128xf32> to vector<8x128xf32>
    %112 = arith.addf %109, %111 : vector<8x128xf32>
    %cst_41 = arith.constant 0.000000e+00 : f32
    %113 = vector.broadcast %cst_41 : f32 to vector<8x128xf32>
    %114 = arith.maximumf %112, %113 : vector<8x128xf32>
    %115 = arith.truncf %114 : vector<8x128xf32> to vector<8x128xbf16>
    %c1024 = arith.constant 1024 : index
    %c0_42 = arith.constant 0 : index
    %116 = vector.load %arg1[%c1024, %c0_42] : memref<1280x128xbf16, #tpu.memory_space<vmem>>, vector<128x128xbf16>
    %cst_43 = arith.constant dense<0.000000e+00> : vector<8x128xf32>
    %117 = tpu.matmul %115, %116, %cst_43 {dimension_numbers = #tpu.dot_dimension_numbers<[1], [0], [0], [1], [0, 0, 1, 1], [], []>} : vector<8x128xbf16>, vector<128x128xbf16>, vector<8x128xf32> -> vector<8x128xf32>
    %c8 = arith.constant 8 : index
    %c0_44 = arith.constant 0 : index
    %118 = vector.load %arg2[%c8, %c0_44] : memref<16x128xf32, #tpu.memory_space<vmem>>, vector<1x128xf32>
    %119 = vector.broadcast %118 : vector<1x128xf32> to vector<8x128xf32>
    %120 = arith.addf %117, %119 : vector<8x128xf32>
    %121 = arith.addf %87, %120 : vector<8x128xf32>
    %122 = arith.mulf %121, %121 : vector<8x128xf32>
    %c32_i32_45 = arith.constant 32 : i32
    %123 = tpu.dynamic_rotate %122 by %c32_i32_45 dim 1 : vector<8x128xf32>, i32 -> vector<8x128xf32>
    %124 = arith.addf %121, %123 : vector<8x128xf32>
    %cst_46 = arith.constant dense<0.000000e+00> : vector<128xf32>
    %125 = vector.multi_reduction <add>, %124, %cst_46 [0] : vector<8x128xf32> to vector<128xf32>
    %126 = vector.shape_cast %125 : vector<128xf32> to vector<1x128xf32>
    %cst_47 = arith.constant 8.000000e+00 : f32
    %127 = vector.broadcast %cst_47 : f32 to vector<1x128xf32>
    %128 = arith.divf %126, %127 : vector<1x128xf32>
    %129 = vector.shape_cast %128 : vector<1x128xf32> to vector<1x128xf32>
    %130 = vector.broadcast %129 : vector<1x128xf32> to vector<8x128xf32>
    %c96_i32_48 = arith.constant 96 : i32
    %131 = tpu.dynamic_rotate %130 by %c96_i32_48 dim 1 : vector<8x128xf32>, i32 -> vector<8x128xf32>
    %132 = arith.mulf %130, %130 : vector<8x128xf32>
    %133 = arith.subf %131, %132 : vector<8x128xf32>
    %cst_49 = arith.constant 0.000000e+00 : f32
    %134 = vector.broadcast %cst_49 : f32 to vector<8x128xf32>
    %135 = arith.maximumf %133, %134 : vector<8x128xf32>
    %136 = arith.subf %121, %130 : vector<8x128xf32>
    %cst_50 = arith.constant 9.99999974E-6 : f32
    %137 = vector.broadcast %cst_50 : f32 to vector<8x128xf32>
    %138 = arith.addf %135, %137 : vector<8x128xf32>
    %139 = math.rsqrt %138 : vector<8x128xf32>
    %140 = arith.mulf %136, %139 : vector<8x128xf32>
    %c9 = arith.constant 9 : index
    %c0_51 = arith.constant 0 : index
    %141 = vector.load %arg2[%c9, %c0_51] : memref<16x128xf32, #tpu.memory_space<vmem>>, vector<1x128xf32>
    %142 = vector.broadcast %141 : vector<1x128xf32> to vector<8x128xf32>
    %143 = arith.mulf %140, %142 : vector<8x128xf32>
    %c10 = arith.constant 10 : index
    %c0_52 = arith.constant 0 : index
    %144 = vector.load %arg2[%c10, %c0_52] : memref<16x128xf32, #tpu.memory_space<vmem>>, vector<1x128xf32>
    %145 = vector.broadcast %144 : vector<1x128xf32> to vector<8x128xf32>
    %146 = arith.addf %143, %145 : vector<8x128xf32>
    %cst_53 = arith.constant 0.000000e+00 : f32
    %147 = vector.broadcast %cst_53 : f32 to vector<8x128xf32>
    %148 = arith.maximumf %146, %147 : vector<8x128xf32>
    %149 = arith.truncf %148 : vector<8x128xf32> to vector<8x128xbf16>
    %c1152 = arith.constant 1152 : index
    %c0_54 = arith.constant 0 : index
    %150 = vector.load %arg1[%c1152, %c0_54] : memref<1280x128xbf16, #tpu.memory_space<vmem>>, vector<128x128xbf16>
    %cst_55 = arith.constant dense<0.000000e+00> : vector<8x128xf32>
    %151 = tpu.matmul %149, %150, %cst_55 {dimension_numbers = #tpu.dot_dimension_numbers<[1], [0], [0], [1], [0, 0, 1, 1], [], []>} : vector<8x128xbf16>, vector<128x128xbf16>, vector<8x128xf32> -> vector<8x128xf32>
    %c11 = arith.constant 11 : index
    %c0_56 = arith.constant 0 : index
    %152 = vector.load %arg2[%c11, %c0_56] : memref<16x128xf32, #tpu.memory_space<vmem>>, vector<1x128xf32>
    %153 = vector.broadcast %152 : vector<1x128xf32> to vector<8x128xf32>
    %154 = arith.addf %151, %153 : vector<8x128xf32>
    %c0_57 = arith.constant 0 : index
    %c0_58 = arith.constant 0 : index
    %155 = vector.load %arg3[%c0_57, %c0_58] : memref<8x128xf32, #tpu.memory_space<vmem>>, vector<8x128xf32>
    tpu.vector_store %arg3[%c0_57, %c0_58], %154 {strides = array<i32>} : memref<8x128xf32, #tpu.memory_space<vmem>>, vector<8x128xf32>,
    return
  }
}

</mosaic_0001>

<llo_original>
// kernel: resnet_diffusion_forward.1
$region0: #{resnet_diffusion_forward.1}
  #allocation0 [shape = 'u32[]', space=smem, size = 0x4, offset = 0x4, fixed_abs, tag = 'smem constant byte address 0x4 - core index']
  #allocation1 [shape = 'u32[72,128]{1,0:T(1,128)}', space=vmem, size = 0x9000, scoped, tag = 'internal scratch']
  %s0 = inlined_call_operand.vmem [shape: f32[8,128], index: 0, kind: input, shape index: {}]
  %s1 = inlined_call_operand.hbm [shape: bf16[1280,128], index: 1, kind: input, shape index: {}]
  %s2 = inlined_call_operand.vmem [shape: f32[16,128], index: 2, kind: input, shape index: {}]
  %s3 = inlined_call_operand.hbm [shape: f32[8,128], index: 3, kind: output, shape index: {}]
  %s4 = sld [smem:[#allocation0]]
  $region26: #{resnet_diffusion_forward.1} parent=0
    _
  %s6 = ssub.s32 1, %s4
  %s7 = scalar_select 0, %s6, %s4
  $region1: #{resnet_diffusion_forward.1} parent=0
    #allocation2 [shape = 'u8[327680]{0}', space=vmem, size = 0x50000, scoped, tag = 'input window, operand 1, single buffered']
    #allocation3 [shape = 's32[1]{0}', space=sflag, size = 0x4, scoped, tag = 'scoped memory for resnet_diffusion_forward.1']
    #allocation4 [shape = 's32[1]{0}', space=sflag, size = 0x4, scoped, tag = 'scoped memory for resnet_diffusion_forward.1']
    #allocation5 [shape = 'u8[4096]{0}', space=vmem, size = 0x1000, scoped, tag = 'output window, operand 0, single buffered']
    %8 = vsyncpa [#allocation3], 0
    %9 = vsyncpa [#allocation4], 0
    // Predicated region
    $region2: #{resnet_diffusion_forward.1} parent=1 // pred_check
      _
    $region3: #{resnet_diffusion_forward.1} parent=1 // pred_check_branch
      %11 = sbr.rel (0) target = $region5
    $region4: #{resnet_diffusion_forward.1} parent=1 // pred_region
      _
    $region5: #{resnet_diffusion_forward.1} parent=1 // pred_fallthru
      _
    // Predicated region
    $region6: #{resnet_diffusion_forward.1} parent=1 // pred_check
      _
    $region7: #{resnet_diffusion_forward.1} parent=1 // pred_check_branch
      %13 = sbr.rel (0) target = $region9
    $region8: #{resnet_diffusion_forward.1} parent=1 // pred_region
      %15 = vsyncadd [#allocation3], 0
      %s16 = sshll.u32 %s1, 4
      %s17 = int_to_ptr.hbm [resolvable:$true] %s16
      %s18 = sshll.u32 [#allocation2], 4
      %s19 = int_to_ptr.vmem [resolvable:$true] %s18
      %24 = dma.hbm_to_vmem [thread:$0]  %s17, 10240, %s19, [#allocation3], 64, 64, 4
    $region9: #{resnet_diffusion_forward.1} parent=1 // pred_fallthru
      _
    // Predicated region
    $region10: #{resnet_diffusion_forward.1} parent=1 // pred_check
      _
    $region11: #{resnet_diffusion_forward.1} parent=1 // pred_check_branch
      %26 = sbr.rel (0) target = $region13
    $region12: #{resnet_diffusion_forward.1} parent=1 // pred_region
      _
    $region13: #{resnet_diffusion_forward.1} parent=1 // pred_fallthru
      _
    // Predicated region
    $region14: #{resnet_diffusion_forward.1} parent=1 // pred_check
      _
    $region15: #{resnet_diffusion_forward.1} parent=1 // pred_check_branch
      %28 = sbr.rel (0) target = $region17
    $region16: #{resnet_diffusion_forward.1} parent=1 // pred_region
      %30 = dma.done [#allocation3], 10240
    $region17: #{resnet_diffusion_forward.1} parent=1 // pred_fallthru
      _
    %v31 = vld [vmem:[%s0] sm:$0xff]
    %v32 = vld [vmem:[%s2] sm:$0x1]
    %34 = vset.pattern.permute.xlu0 16
    %35 = vperm.xlu0 %34, %v31
    %v36 = vpop.permute.xlu0 %35
    %v38 = vperm.slane %v32, 0
    %v39 = vmul.f32 %v36, %v38
    %v40 = vld [vmem:[%s2 + $0x1] sm:$0x1]
    %v41 = vperm.slane %v40, 0
    %v42 = vadd.f32 %v39, %v41
    %v43 = vand.u32 2147483647, %v42
    %vm44 = vcmp.le.f32.partialorder %v43, 0.7853982
    %vm45 = vcmp.lt.s32.totalorder %v42, 0
    %v46 = vand.u32 %v42, 2139095040
    %v47 = vshrl.u32 %v46, 23
    %v48 = vsub.s32 %v47, 127
    %v49 = vand.u32 2147483647, %v42
    %v50 = vand.u32 %v49, 8388607
    %v51 = vor.u32 %v50, 8388608
    %v52 = vsub.s32 0, %v51
    %v53 = vadd.s32 %v48, 1
    %vm54 = vcmp.gt.s32.totalorder %v53, 0
    %v55 = vsel %vm54, %v53, 0
    %v56 = vshrl.u32 %v55, 5
    %v57 = vand.u32 %v55, 31
    %v58 = vsub.s32 32, %v57
    %v59 = vshrl.u32 683565275, %v58
    %v60 = vshll.u32 683565275, %v57
    %v61 = vshrl.u32 2475754826, %v58
    %v62 = vor.u32 %v60, %v61
    %v63 = vshll.u32 2475754826, %v57
    %v64 = vshrl.u32 2131351028, %v58
    %v65 = vor.u32 %v63, %v64
    %v66 = vshll.u32 2131351028, %v57
    %v67 = vshrl.u32 2102212464, %v58
    %v68 = vor.u32 %v66, %v67
    %v69 = vshll.u32 2102212464, %v57
    %v70 = vshrl.u32 920167782, %v58
    %v71 = vor.u32 %v69, %v70
    %v72 = vshll.u32 920167782, %v57
    %v73 = vshrl.u32 1326507024, %v58
    %v74 = vor.u32 %v72, %v73
    %vm75 = vcmp.lt.s32.totalorder %v56, 1
    %vm76 = vcmp.lt.s32.totalorder %v56, 2
    %vm77 = vcmp.lt.s32.totalorder %v56, 3
    %vm78 = vcmp.lt.s32.totalorder %v56, 4
    %v79 = vsel %vm75, %v59, %v62
    %v80 = vsel %vm78, %v68, 2102212464
    %v81 = vsel %vm77, %v65, %v80
    %v82 = vsel %vm76, %v79, %v81
    %v83 = vsel %vm75, %v62, %v65
    %v84 = vsel %vm78, %v71, 920167782
    %v85 = vsel %vm77, %v68, %v84
    %v86 = vsel %vm76, %v83, %v85
    %v87 = vsel %vm75, %v65, %v68
    %v88 = vsel %vm78, %v74, 1326507024
    %v89 = vsel %vm77, %v71, %v88
    %v90 = vsel %vm76, %v87, %v89
    %v91 = vshll.u32 %v51, 8
    %v92 = vand.u32 %v91, 65535
    %v93 = vshrl.u32 %v91, 16
    %v94 = vand.u32 %v90, 65535
    %v95 = vshrl.u32 %v90, 16
    %v96 = vmul.u32 %v92, %v94
    %v97 = vmul.u32 %v92, %v95
    %v98 = vmul.u32 %v93, %v94
    %v99 = vmul.u32 %v93, %v95
    %v100 = vshll.u32 %v97, 16
    %v101 = vshrl.u32 %v97, 16
    %v102 = vshll.u32 %v98, 16
    %v103 = vshrl.u32 %v98, 16
    %vm104 = vc.u32 %v96, %v100
    %v105 = vsel %vm104, 1, 0
    %v106 = vadd.s32 %v96, %v100
    %v107 = vadd.s32 %v99, %v105
    %vm108 = vc.u32 %v106, %v102
    %v109 = vsel %vm108, 1, 0
    %v110 = vadd.s32 %v106, %v102
    %v111 = vadd.s32 %v107, %v109
    %v112 = vadd.s32 %v111, %v101
    %v113 = vadd.s32 %v112, %v103
    %v114 = vand.u32 %v91, 65535
    %v115 = vshrl.u32 %v91, 16
    %v116 = vand.u32 %v86, 65535
    %v117 = vshrl.u32 %v86, 16
    %v118 = vmul.u32 %v114, %v116
    %v119 = vmul.u32 %v114, %v117
    %v120 = vmul.u32 %v115, %v116
    %v121 = vmul.u32 %v115, %v117
    %v122 = vshll.u32 %v119, 16
    %v123 = vshrl.u32 %v119, 16
    %v124 = vshll.u32 %v120, 16
    %v125 = vshrl.u32 %v120, 16
    %vm126 = vc.u32 %v118, %v122
    %v127 = vsel %vm126, 1, 0
    %v128 = vadd.s32 %v118, %v122
    %v129 = vadd.s32 %v121, %v127
    %vm130 = vc.u32 %v128, %v124
    %v131 = vsel %vm130, 1, 0
    %v132 = vadd.s32 %v128, %v124
    %v133 = vadd.s32 %v129, %v131
    %v134 = vadd.s32 %v133, %v123
    %v135 = vadd.s32 %v134, %v125
    %v136 = vmul.u32 %v91, %v82
    %v137 = vadd.s32 %v113, %v132
    %vm138 = vc.u32 %v113, %v132
    %v139 = vadd.s32 %v135, 1
    %v140 = vsel %vm138, %v139, %v135
    %v141 = vadd.s32 %v136, %v140
    %v142 = vadd.s32 %v141, 536870912
    %v143 = vshrl.u32 %v142, 30
    %v144 = vshll.u32 %v143, 30
    %v145 = vsub.s32 %v141, %v144
    %vm146 = vcmp.lt.s32.totalorder %v145, 0
    %v147 = vsub.s32 0, %v145
    %v148 = vsel %vm146, %v147, %v145
    %v149 = vclz %v148
    %v150 = vsub.s32 %v149, 2
    %vm151 = vcmp.gt.s32.totalorder 0, %v150
    %v152 = vsel %vm151, 0, %v150
    %v153 = vsub.s32 32, %v152
    %v154 = vshll.u32 %v145, %v152
    %v155 = vshrl.u32 %v137, %v153
    %v156 = vor.u32 %v154, %v155
    %v157 = vsub.s32 4294967266, %v152
    %v158 = vadd.s32 %v157, 127
    %v159 = vshll.u32 %v158, 23
    %v160 = vor.u32 4788187, %v159
    %v161 = vand.u32 2147483647, %v160
    %v163 = vcvt.s32.f32 %v156
    %v164 = vmul.f32 %v163, %v161
    %v165 = vxor.u32 %v164, 2147483648
    %v166 = vsel %vm45, %v165, %v164
    %v167 = vsub.s32 4, %v143
    %v168 = vsel %vm45, %v167, %v143
    %v169 = vsel %vm44, %v42, %v166
    %v170 = vsel %vm44, 0, %v168
    %v171 = vmul.f32 %v169, %v169
    %v172 = vmul.f32 %v171, -0.001358992
    %v173 = vadd.f32 %v172, 0.041655596
    %v174 = vmul.f32 %v171, %v173
    %v175 = vadd.f32 %v174, -0.4999988
    %v176 = vmul.f32 %v171, %v175
    %v177 = vadd.f32 1.0, %v176
    %v178 = vmul.f32 %v169, %v169
    %v179 = vmul.f32 %v178, -0.00019511016
    %v180 = vadd.f32 %v179, 0.008332121
    %v181 = vmul.f32 %v178, %v180
    %v182 = vadd.f32 %v181, -0.16666654
    %v183 = vmul.f32 %v178, %v182
    %v184 = vadd.f32 %v183, 1.0
    %v185 = vmul.f32 %v184, %v169
    %vm186 = vweird.f32 %v42
    %v187 = vand.u32 %v170, 3
    %vm188 = vcmp.lt.s32.totalorder %v187, 2
    %vm189 = vcmp.eq.s32.totalorder %v187, 0
    %v190 = vxor.u32 %v185, 2147483648
    %v191 = vsel %vm189, %v177, %v190
    %vm192 = vcmp.eq.s32.totalorder %v187, 2
    %v193 = vxor.u32 %v177, 2147483648
    %v194 = vsel %vm192, %v193, %v185
    %v195 = vsel %vm188, %v191, %v194
    %v196 = vsel %vm186, nan, %v195
    %v197 = vpack.c.bf16 %v196, %v196
    %v198 = vld [vmem:[#allocation2] sm:$0xf]
    %v199 = vld [vmem:[#allocation2 + $0x4] sm:$0xf]
    %v200 = vld [vmem:[#allocation2 + $0x8] sm:$0xf]
    %v201 = vld [vmem:[#allocation2 + $0xc] sm:$0xf]
    %v202 = vld [vmem:[#allocation2 + $0x10] sm:$0xf]
    %v203 = vld [vmem:[#allocation2 + $0x14] sm:$0xf]
    %v204 = vld [vmem:[#allocation2 + $0x18] sm:$0xf]
    %v205 = vld [vmem:[#allocation2 + $0x1c] sm:$0xf]
    %v206 = vld [vmem:[#allocation2 + $0x20] sm:$0xf]
    %v207 = vld [vmem:[#allocation2 + $0x24] sm:$0xf]
    %v208 = vld [vmem:[#allocation2 + $0x28] sm:$0xf]
    %v209 = vld [vmem:[#allocation2 + $0x2c] sm:$0xf]
    %v210 = vld [vmem:[#allocation2 + $0x30] sm:$0xf]
    %v211 = vld [vmem:[#allocation2 + $0x34] sm:$0xf]
    %v212 = vld [vmem:[#allocation2 + $0x38] sm:$0xf]
    %v213 = vld [vmem:[#allocation2 + $0x3c] sm:$0xf]
    %v214 = vld [vmem:[%s2 + $0x2] sm:$0x1]
    %v215 = vperm.slane %v214, 0
    %v232 = vunpack.c.l.b16 %v198
    %v233 = vunpack.c.l.b16 %v199
    %v234 = vunpack.c.l.b16 %v200
    %v235 = vunpack.c.l.b16 %v201
    %v236 = vunpack.c.l.b16 %v202
    %v237 = vunpack.c.l.b16 %v203
    %v238 = vunpack.c.l.b16 %v204
    %v239 = vunpack.c.l.b16 %v205
    %v240 = vunpack.c.l.b16 %v206
    %v241 = vunpack.c.l.b16 %v207
    %v242 = vunpack.c.l.b16 %v208
    %v243 = vunpack.c.l.b16 %v209
    %v244 = vunpack.c.l.b16 %v210
    %v245 = vunpack.c.l.b16 %v211
    %v246 = vunpack.c.l.b16 %v212
    %v247 = vunpack.c.l.b16 %v213
    %v248 = vpack.c.b16 %v233, %v232
    %v249 = vpack.c.b16 %v235, %v234
    %v250 = vpack.c.b16 %v237, %v236
    %v251 = vpack.c.b16 %v239, %v238
    %v252 = vpack.c.b16 %v241, %v240
    %v253 = vpack.c.b16 %v243, %v242
    %v254 = vpack.c.b16 %v245, %v244
    %v255 = vpack.c.b16 %v247, %v246
    %264 = vmatpush.bf16.msra.mxu0 %v255
    %265 = vmatpush.bf16.msra.mxu0 %v254
    %266 = vmatpush.bf16.msra.mxu0 %v253
    %267 = vmatpush.bf16.msra.mxu0 %v252
    %268 = vmatpush.bf16.msra.mxu0 %v251
    %269 = vmatpush.bf16.msra.mxu0 %v250
    %270 = vmatpush.bf16.msra.mxu0 %v249
    %271 = vmatpush.bf16.msra.mxu0 %v248
    %272 = vmatmul.bf16.gmra.mxu0 %v197
    %v273 = vpop.f32.mrf.mxu0
    %v274 = vadd.f32 %v215, %v273
    %v275 = vpop.f32.mrf.mxu0
    %276 = vdwg.mxu0
    %v277 = vlaneseq
    %v278 = vand.u32 %v277, 127
    %v279 = vcvt.f32.s32.to.zero.pseudo %v31
    %280 = vset.pattern.permute.xlu0 17
    %281 = vperm.xlu0 %280, %v279
    %v282 = vpop.permute.xlu0 %281
    %vm283 = vcmp.eq.s32.totalorder %v278, %v282
    %v284 = vsel %vm283, 1.0, 0.0
    %v285 = vmul.f32 %v274, 0.5
    %v286 = vtanh.pop %v285
    %v287 = vmul.f32 %v286, 0.5
    %v288 = vadd.f32 %v287, 0.5
    %v289 = vmul.f32 %v274, %v288
    %v290 = vpack.c.bf16 %v289, %v289
    %v291 = vpack.c.bf16 %v284, %v284
    %v292 = vld [vmem:[#allocation2 + $0x40] sm:$0xf]
    %v293 = vld [vmem:[#allocation2 + $0x44] sm:$0xf]
    %v294 = vld [vmem:[#allocation2 + $0x48] sm:$0xf]
    %v295 = vld [vmem:[#allocation2 + $0x4c] sm:$0xf]
    %v296 = vld [vmem:[#allocation2 + $0x50] sm:$0xf]
    %v297 = vld [vmem:[#allocation2 + $0x54] sm:$0xf]
    %v298 = vld [vmem:[#allocation2 + $0x58] sm:$0xf]
    %v299 = vld [vmem:[#allocation2 + $0x5c] sm:$0xf]
    %v300 = vld [vmem:[#allocation2 + $0x60] sm:$0xf]
    %v301 = vld [vmem:[#allocation2 + $0x64] sm:$0xf]
    %v302 = vld [vmem:[#allocation2 + $0x68] sm:$0xf]
    %v303 = vld [vmem:[#allocation2 + $0x6c] sm:$0xf]
    %v304 = vld [vmem:[#allocation2 + $0x70] sm:$0xf]
    %v305 = vld [vmem:[#allocation2 + $0x74] sm:$0xf]
    %v306 = vld [vmem:[#allocation2 + $0x78] sm:$0xf]
    %v307 = vld [vmem:[#allocation2 + $0x7c] sm:$0xf]
    %v308 = vld [vmem:[#allocation2 + $0x80] sm:$0xf]
    %v309 = vld [vmem:[#allocation2 + $0x84] sm:$0xf]
    %v310 = vld [vmem:[#allocation2 + $0x88] sm:$0xf]
    %v311 = vld [vmem:[#allocation2 + $0x8c] sm:$0xf]
    %v312 = vld [vmem:[#allocation2 + $0x90] sm:$0xf]
    %v313 = vld [vmem:[#allocation2 + $0x94] sm:$0xf]
    %v314 = vld [vmem:[#allocation2 + $0x98] sm:$0xf]
    %v315 = vld [vmem:[#allocation2 + $0x9c] sm:$0xf]
    %v316 = vld [vmem:[#allocation2 + $0xa0] sm:$0xf]
    %v317 = vld [vmem:[#allocation2 + $0xa4] sm:$0xf]
    %v318 = vld [vmem:[#allocation2 + $0xa8] sm:$0xf]
    %v319 = vld [vmem:[#allocation2 + $0xac] sm:$0xf]
    %v320 = vld [vmem:[#allocation2 + $0xb0] sm:$0xf]
    %v321 = vld [vmem:[#allocation2 + $0xb4] sm:$0xf]
    %v322 = vld [vmem:[#allocation2 + $0xb8] sm:$0xf]
    %v323 = vld [vmem:[#allocation2 + $0xbc] sm:$0xf]
    %v324 = vld [vmem:[%s2 + $0x3] sm:$0x1]
    %v325 = vperm.slane %v324, 0
    %v358 = vunpack.c.l.b16 %v292
    %v359 = vunpack.c.l.b16 %v293
    %v360 = vunpack.c.l.b16 %v294
    %v361 = vunpack.c.l.b16 %v295
    %v362 = vunpack.c.l.b16 %v296
    %v363 = vunpack.c.l.b16 %v297
    %v364 = vunpack.c.l.b16 %v298
    %v365 = vunpack.c.l.b16 %v299
    %v366 = vunpack.c.l.b16 %v300
    %v367 = vunpack.c.l.b16 %v301
    %v368 = vunpack.c.l.b16 %v302
    %v369 = vunpack.c.l.b16 %v303
    %v370 = vunpack.c.l.b16 %v304
    %v371 = vunpack.c.l.b16 %v305
    %v372 = vunpack.c.l.b16 %v306
    %v373 = vunpack.c.l.b16 %v307
    %v374 = vunpack.c.l.b16 %v308
    %v375 = vunpack.c.l.b16 %v309
    %v376 = vunpack.c.l.b16 %v310
    %v377 = vunpack.c.l.b16 %v311
    %v378 = vunpack.c.l.b16 %v312
    %v379 = vunpack.c.l.b16 %v313
    %v380 = vunpack.c.l.b16 %v314
    %v381 = vunpack.c.l.b16 %v315
    %v382 = vunpack.c.l.b16 %v316
    %v383 = vunpack.c.l.b16 %v317
    %v384 = vunpack.c.l.b16 %v318
    %v385 = vunpack.c.l.b16 %v319
    %v386 = vunpack.c.l.b16 %v320
    %v387 = vunpack.c.l.b16 %v321
    %v388 = vunpack.c.l.b16 %v322
    %v389 = vunpack.c.l.b16 %v323
    %v390 = vpack.c.b16 %v359, %v358
    %v391 = vpack.c.b16 %v361, %v360
    %v392 = vpack.c.b16 %v363, %v362
    %v393 = vpack.c.b16 %v365, %v364
    %v394 = vpack.c.b16 %v367, %v366
    %v395 = vpack.c.b16 %v369, %v368
    %v396 = vpack.c.b16 %v371, %v370
    %v397 = vpack.c.b16 %v373, %v372
    %v398 = vpack.c.b16 %v375, %v374
    %v399 = vpack.c.b16 %v377, %v376
    %v400 = vpack.c.b16 %v379, %v378
    %v401 = vpack.c.b16 %v381, %v380
    %v402 = vpack.c.b16 %v383, %v382
    %v403 = vpack.c.b16 %v385, %v384
    %v404 = vpack.c.b16 %v387, %v386
    %v405 = vpack.c.b16 %v389, %v388
    %422 = vmatpush.bf16.msra.mxu0 %v397
    %423 = vmatpush.bf16.msra.mxu0 %v396
    %424 = vmatpush.bf16.msra.mxu0 %v395
    %425 = vmatpush.bf16.msra.mxu0 %v394
    %426 = vmatpush.bf16.msra.mxu0 %v393
    %427 = vmatpush.bf16.msra.mxu0 %v392
    %428 = vmatpush.bf16.msra.mxu0 %v391
    %429 = vmatpush.bf16.msra.mxu0 %v390
    %430 = vmatmul.bf16.gmra.mxu0 %v290
    %v431 = vpop.f32.mrf.mxu0
    %v432 = vadd.f32 %v325, %v431
    %v433 = vpop.f32.mrf.mxu0
    %434 = vdwg.mxu0
    %435 = vmatpush.bf16.msra.mxu0 %v405
    %436 = vmatpush.bf16.msra.mxu0 %v404
    %437 = vmatpush.bf16.msra.mxu0 %v403
    %438 = vmatpush.bf16.msra.mxu0 %v402
    %439 = vmatpush.bf16.msra.mxu0 %v401
    %440 = vmatpush.bf16.msra.mxu0 %v400
    %441 = vmatpush.bf16.msra.mxu0 %v399
    %442 = vmatpush.bf16.msra.mxu0 %v398
    %443 = vmatmul.bf16.gmra.mxu0 %v291
    %v444 = vpop.f32.mrf.mxu0
    %v445 = vadd.f32 %v432, %v444
    %v446 = vpop.f32.mrf.mxu0
    %447 = vdwg.mxu0
    %v448 = vmul.f32 %v445, 0.5
    %v449 = vtanh.pop %v448
    %v450 = vmul.f32 %v449, 0.5
    %v451 = vadd.f32 %v450, 0.5
    %v452 = vmul.f32 %v445, %v451
    %v453 = vpack.c.bf16 %v31, %v31
    %v454 = vpack.c.bf16 %v452, %v452
    %v455 = vld [vmem:[#allocation2 + $0xc0] sm:$0xf]
    %v456 = vld [vmem:[#allocation2 + $0xc4] sm:$0xf]
    %v457 = vld [vmem:[#allocation2 + $0xc8] sm:$0xf]
    %v458 = vld [vmem:[#allocation2 + $0xcc] sm:$0xf]
    %v459 = vld [vmem:[#allocation2 + $0xd0] sm:$0xf]
    %v460 = vld [vmem:[#allocation2 + $0xd4] sm:$0xf]
    %v461 = vld [vmem:[#allocation2 + $0xd8] sm:$0xf]
    %v462 = vld [vmem:[#allocation2 + $0xdc] sm:$0xf]
    %v463 = vld [vmem:[#allocation2 + $0xe0] sm:$0xf]
    %v464 = vld [vmem:[#allocation2 + $0xe4] sm:$0xf]
    %v465 = vld [vmem:[#allocation2 + $0xe8] sm:$0xf]
    %v466 = vld [vmem:[#allocation2 + $0xec] sm:$0xf]
    %v467 = vld [vmem:[#allocation2 + $0xf0] sm:$0xf]
    %v468 = vld [vmem:[#allocation2 + $0xf4] sm:$0xf]
    %v469 = vld [vmem:[#allocation2 + $0xf8] sm:$0xf]
    %v470 = vld [vmem:[#allocation2 + $0xfc] sm:$0xf]
    %v471 = vld [vmem:[#allocation2 + $0x100] sm:$0xf]
    %v472 = vld [vmem:[#allocation2 + $0x104] sm:$0xf]
    %v473 = vld [vmem:[#allocation2 + $0x108] sm:$0xf]
    %v474 = vld [vmem:[#allocation2 + $0x10c] sm:$0xf]
    %v475 = vld [vmem:[#allocation2 + $0x110] sm:$0xf]
    %v476 = vld [vmem:[#allocation2 + $0x114] sm:$0xf]
    %v477 = vld [vmem:[#allocation2 + $0x118] sm:$0xf]
    %v478 = vld [vmem:[#allocation2 + $0x11c] sm:$0xf]
    %v479 = vld [vmem:[#allocation2 + $0x120] sm:$0xf]
    %v480 = vld [vmem:[#allocation2 + $0x124] sm:$0xf]
    %v481 = vld [vmem:[#allocation2 + $0x128] sm:$0xf]
    %v482 = vld [vmem:[#allocation2 + $0x12c] sm:$0xf]
    %v483 = vld [vmem:[#allocation2 + $0x130] sm:$0xf]
    %v484 = vld [vmem:[#allocation2 + $0x134] sm:$0xf]
    %v485 = vld [vmem:[#allocation2 + $0x138] sm:$0xf]
    %v486 = vld [vmem:[#allocation2 + $0x13c] sm:$0xf]
    %v487 = vld [vmem:[%s2 + $0x4] sm:$0x1]
    %v488 = vperm.slane %v487, 0
    %v521 = vunpack.c.l.b16 %v455
    %v522 = vunpack.c.l.b16 %v456
    %v523 = vunpack.c.l.b16 %v457
    %v524 = vunpack.c.l.b16 %v458
    %v525 = vunpack.c.l.b16 %v459
    %v526 = vunpack.c.l.b16 %v460
    %v527 = vunpack.c.l.b16 %v461
    %v528 = vunpack.c.l.b16 %v462
    %v529 = vunpack.c.l.b16 %v463
    %v530 = vunpack.c.l.b16 %v464
    %v531 = vunpack.c.l.b16 %v465
    %v532 = vunpack.c.l.b16 %v466
    %v533 = vunpack.c.l.b16 %v467
    %v534 = vunpack.c.l.b16 %v468
    %v535 = vunpack.c.l.b16 %v469
    %v536 = vunpack.c.l.b16 %v470
    %v537 = vunpack.c.l.b16 %v471
    %v538 = vunpack.c.l.b16 %v472
    %v539 = vunpack.c.l.b16 %v473
    %v540 = vunpack.c.l.b16 %v474
    %v541 = vunpack.c.l.b16 %v475
    %v542 = vunpack.c.l.b16 %v476
    %v543 = vunpack.c.l.b16 %v477
    %v544 = vunpack.c.l.b16 %v478
    %v545 = vunpack.c.l.b16 %v479
    %v546 = vunpack.c.l.b16 %v480
    %v547 = vunpack.c.l.b16 %v481
    %v548 = vunpack.c.l.b16 %v482
    %v549 = vunpack.c.l.b16 %v483
    %v550 = vunpack.c.l.b16 %v484
    %v551 = vunpack.c.l.b16 %v485
    %v552 = vunpack.c.l.b16 %v486
    %v553 = vpack.c.b16 %v522, %v521
    %v554 = vpack.c.b16 %v524, %v523
    %v555 = vpack.c.b16 %v526, %v525
    %v556 = vpack.c.b16 %v528, %v527
    %v557 = vpack.c.b16 %v530, %v529
    %v558 = vpack.c.b16 %v532, %v531
    %v559 = vpack.c.b16 %v534, %v533
    %v560 = vpack.c.b16 %v536, %v535
    %v561 = vpack.c.b16 %v538, %v537
    %v562 = vpack.c.b16 %v540, %v539
    %v563 = vpack.c.b16 %v542, %v541
    %v564 = vpack.c.b16 %v544, %v543
    %v565 = vpack.c.b16 %v546, %v545
    %v566 = vpack.c.b16 %v548, %v547
    %v567 = vpack.c.b16 %v550, %v549
    %v568 = vpack.c.b16 %v552, %v551
    %585 = vmatpush.bf16.msra.mxu0 %v560
    %586 = vmatpush.bf16.msra.mxu0 %v559
    %587 = vmatpush.bf16.msra.mxu0 %v558
    %588 = vmatpush.bf16.msra.mxu0 %v557
    %589 = vmatpush.bf16.msra.mxu0 %v556
    %590 = vmatpush.bf16.msra.mxu0 %v555
    %591 = vmatpush.bf16.msra.mxu0 %v554
    %592 = vmatpush.bf16.msra.mxu0 %v553
    %593 = vmatmul.bf16.gmra.mxu0 %v453
    %v594 = vpop.f32.mrf.mxu0
    %v595 = vadd.f32 %v488, %v594
    %v596 = vpop.f32.mrf.mxu0
    %597 = vdwg.mxu0
    %598 = vmatpush.bf16.msra.mxu0 %v568
    %599 = vmatpush.bf16.msra.mxu0 %v567
    %600 = vmatpush.bf16.msra.mxu0 %v566
    %601 = vmatpush.bf16.msra.mxu0 %v565
    %602 = vmatpush.bf16.msra.mxu0 %v564
    %603 = vmatpush.bf16.msra.mxu0 %v563
    %604 = vmatpush.bf16.msra.mxu0 %v562
    %605 = vmatpush.bf16.msra.mxu0 %v561
    %606 = vmatmul.bf16.gmra.mxu0 %v454
    %v607 = vpop.f32.mrf.mxu0
    %v608 = vadd.f32 %v595, %v607
    %v609 = vpop.f32.mrf.mxu0
    %610 = vdwg.mxu0
    %v611 = vmul.f32 %v608, %v608
    %612 = vrot.lane.b32.xlu0 %v611, 32
    %v613 = vpop.permute.xlu0 %612
    %v614 = vadd.f32 %v608, %v613
    %v615 = vrot.slane %v614, 4
    %v616 = vadd.f32 %v614, %v615
    %v617 = vrot.slane %v616, 2
    %v618 = vadd.f32 %v616, %v617
    %v619 = vrot.slane %v618, 1
    %v620 = vadd.f32 %v618, %v619
    %v621 = vrcp.pop 8.0
    %v622 = vmul.f32 8.0, %v621
    %v623 = vsub.f32 1.0, %v622
    %v624 = vmul.f32 %v621, %v623
    %v625 = vadd.f32 %v621, %v624
    %vm626 = vweird.f32 %v621
    %v627 = vsel %vm626, %v621, %v625
    %v628 = vmul.f32 %v620, %v627
    %629 = vrot.lane.b32.xlu0 %v628, 96
    %v630 = vpop.permute.xlu0 %629
    %v631 = vmul.f32 %v628, %v628
    %v632 = vsub.f32 %v630, %v631
    %v633 = vmax.f32 %v632, 0.0
    %v634 = vsub.f32 %v608, %v628
    %v635 = vadd.f32 %v633, 1e-05
    %v636 = vrsqrt.pop %v635
    %v637 = vmul.f32 %v636, %v635
    %v638 = vmul.f32 %v637, %v636
    %v639 = vmul.f32 0.5, %v638
    %v640 = vsub.f32 1.5, %v639
    %v641 = vmul.f32 %v636, %v640
    %vm642 = vweird.f32 %v635
    %vm643 = vweird.f32 %v636
    %vm644 = vmor %vm642, %vm643
    %v645 = vsel %vm644, %v636, %v641
    %v646 = vmul.f32 %v634, %v645
    %v647 = vpack.c.bf16 %v646, %v646
    %v648 = vld [vmem:[#allocation2 + $0x140] sm:$0xf]
    %v649 = vld [vmem:[#allocation2 + $0x144] sm:$0xf]
    %v650 = vld [vmem:[#allocation2 + $0x148] sm:$0xf]
    %v651 = vld [vmem:[#allocation2 + $0x14c] sm:$0xf]
    %v652 = vld [vmem:[#allocation2 + $0x150] sm:$0xf]
    %v653 = vld [vmem:[#allocation2 + $0x154] sm:$0xf]
    %v654 = vld [vmem:[#allocation2 + $0x158] sm:$0xf]
    %v655 = vld [vmem:[#allocation2 + $0x15c] sm:$0xf]
    %v656 = vld [vmem:[#allocation2 + $0x160] sm:$0xf]
    %v657 = vld [vmem:[#allocation2 + $0x164] sm:$0xf]
    %v658 = vld [vmem:[#allocation2 + $0x168] sm:$0xf]
    %v659 = vld [vmem:[#allocation2 + $0x16c] sm:$0xf]
    %v660 = vld [vmem:[#allocation2 + $0x170] sm:$0xf]
    %v661 = vld [vmem:[#allocation2 + $0x174] sm:$0xf]
    %v662 = vld [vmem:[#allocation2 + $0x178] sm:$0xf]
    %v663 = vld [vmem:[#allocation2 + $0x17c] sm:$0xf]
    %v664 = vld [vmem:[%s2 + $0x5] sm:$0x1]
    %v665 = vperm.slane %v664, 0
    %v682 = vunpack.c.l.b16 %v648
    %v683 = vunpack.c.l.b16 %v649
    %v684 = vunpack.c.l.b16 %v650
    %v685 = vunpack.c.l.b16 %v651
    %v686 = vunpack.c.l.b16 %v652
    %v687 = vunpack.c.l.b16 %v653
    %v688 = vunpack.c.l.b16 %v654
    %v689 = vunpack.c.l.b16 %v655
    %v690 = vunpack.c.l.b16 %v656
    %v691 = vunpack.c.l.b16 %v657
    %v692 = vunpack.c.l.b16 %v658
    %v693 = vunpack.c.l.b16 %v659
    %v694 = vunpack.c.l.b16 %v660
    %v695 = vunpack.c.l.b16 %v661
    %v696 = vunpack.c.l.b16 %v662
    %v697 = vunpack.c.l.b16 %v663
    %v698 = vpack.c.b16 %v683, %v682
    %v699 = vpack.c.b16 %v685, %v684
    %v700 = vpack.c.b16 %v687, %v686
    %v701 = vpack.c.b16 %v689, %v688
    %v702 = vpack.c.b16 %v691, %v690
    %v703 = vpack.c.b16 %v693, %v692
    %v704 = vpack.c.b16 %v695, %v694
    %v705 = vpack.c.b16 %v697, %v696
    %714 = vmatpush.bf16.msra.mxu0 %v705
    %715 = vmatpush.bf16.msra.mxu0 %v704
    %716 = vmatpush.bf16.msra.mxu0 %v703
    %717 = vmatpush.bf16.msra.mxu0 %v702
    %718 = vmatpush.bf16.msra.mxu0 %v701
    %719 = vmatpush.bf16.msra.mxu0 %v700
    %720 = vmatpush.bf16.msra.mxu0 %v699
    %721 = vmatpush.bf16.msra.mxu0 %v698
    %722 = vmatmul.bf16.gmra.mxu0 %v647
    %v723 = vpop.f32.mrf.mxu0
    %v724 = vadd.f32 %v665, %v723
    %v725 = vpop.f32.mrf.mxu0
    %726 = vdwg.mxu0
    %v727 = vmax.f32 %v724, 0.0
    %v728 = vpack.c.bf16 %v727, %v727
    %v729 = vld [vmem:[#allocation2 + $0x180] sm:$0xf]
    %v730 = vld [vmem:[#allocation2 + $0x184] sm:$0xf]
    %v731 = vld [vmem:[#allocation2 + $0x188] sm:$0xf]
    %v732 = vld [vmem:[#allocation2 + $0x18c] sm:$0xf]
    %v733 = vld [vmem:[#allocation2 + $0x190] sm:$0xf]
    %v734 = vld [vmem:[#allocation2 + $0x194] sm:$0xf]
    %v735 = vld [vmem:[#allocation2 + $0x198] sm:$0xf]
    %v736 = vld [vmem:[#allocation2 + $0x19c] sm:$0xf]
    %v737 = vld [vmem:[#allocation2 + $0x1a0] sm:$0xf]
    %v738 = vld [vmem:[#allocation2 + $0x1a4] sm:$0xf]
    %v739 = vld [vmem:[#allocation2 + $0x1a8] sm:$0xf]
    %v740 = vld [vmem:[#allocation2 + $0x1ac] sm:$0xf]
    %v741 = vld [vmem:[#allocation2 + $0x1b0] sm:$0xf]
    %v742 = vld [vmem:[#allocation2 + $0x1b4] sm:$0xf]
    %v743 = vld [vmem:[#allocation2 + $0x1b8] sm:$0xf]
    %v744 = vld [vmem:[#allocation2 + $0x1bc] sm:$0xf]
    %v745 = vld [vmem:[%s2 + $0x6] sm:$0x1]
    %v746 = vperm.slane %v745, 0
    %v763 = vunpack.c.l.b16 %v729
    %v764 = vunpack.c.l.b16 %v730
    %v765 = vunpack.c.l.b16 %v731
    %v766 = vunpack.c.l.b16 %v732
    %v767 = vunpack.c.l.b16 %v733
    %v768 = vunpack.c.l.b16 %v734
    %v769 = vunpack.c.l.b16 %v735
    %v770 = vunpack.c.l.b16 %v736
    %v771 = vunpack.c.l.b16 %v737
    %v772 = vunpack.c.l.b16 %v738
    %v773 = vunpack.c.l.b16 %v739
    %v774 = vunpack.c.l.b16 %v740
    %v775 = vunpack.c.l.b16 %v741
    %v776 = vunpack.c.l.b16 %v742
    %v777 = vunpack.c.l.b16 %v743
    %v778 = vunpack.c.l.b16 %v744
    %v779 = vpack.c.b16 %v764, %v763
    %v780 = vpack.c.b16 %v766, %v765
    %v781 = vpack.c.b16 %v768, %v767
    %v782 = vpack.c.b16 %v770, %v769
    %v783 = vpack.c.b16 %v772, %v771
    %v784 = vpack.c.b16 %v774, %v773
    %v785 = vpack.c.b16 %v776, %v775
    %v786 = vpack.c.b16 %v778, %v777
    %795 = vmatpush.bf16.msra.mxu0 %v786
    %796 = vmatpush.bf16.msra.mxu0 %v785
    %797 = vmatpush.bf16.msra.mxu0 %v784
    %798 = vmatpush.bf16.msra.mxu0 %v783
    %799 = vmatpush.bf16.msra.mxu0 %v782
    %800 = vmatpush.bf16.msra.mxu0 %v781
    %801 = vmatpush.bf16.msra.mxu0 %v780
    %802 = vmatpush.bf16.msra.mxu0 %v779
    %803 = vmatmul.bf16.gmra.mxu0 %v728
    %v804 = vpop.f32.mrf.mxu0
    %v805 = vadd.f32 %v746, %v804
    %v806 = vpop.f32.mrf.mxu0
    %807 = vdwg.mxu0
    %v808 = vadd.f32 %v608, %v805
    %v809 = vmul.f32 %v808, %v808
    %810 = vrot.lane.b32.xlu0 %v809, 32
    %v811 = vpop.permute.xlu0 %810
    %v812 = vadd.f32 %v808, %v811
    %v813 = vrot.slane %v812, 4
    %v814 = vadd.f32 %v812, %v813
    %v815 = vrot.slane %v814, 2
    %v816 = vadd.f32 %v814, %v815
    %v817 = vrot.slane %v816, 1
    %v818 = vadd.f32 %v816, %v817
    %v819 = vmul.f32 %v818, %v627
    %820 = vrot.lane.b32.xlu0 %v819, 96
    %v821 = vpop.permute.xlu0 %820
    %v822 = vmul.f32 %v819, %v819
    %v823 = vsub.f32 %v821, %v822
    %v824 = vmax.f32 %v823, 0.0
    %v825 = vsub.f32 %v808, %v819
    %v826 = vadd.f32 %v824, 1e-05
    %v827 = vrsqrt.pop %v826
    %v828 = vmul.f32 %v827, %v826
    %v829 = vmul.f32 %v828, %v827
    %v830 = vmul.f32 0.5, %v829
    %v831 = vsub.f32 1.5, %v830
    %v832 = vmul.f32 %v827, %v831
    %vm833 = vweird.f32 %v826
    %vm834 = vweird.f32 %v827
    %vm835 = vmor %vm833, %vm834
    %v836 = vsel %vm835, %v827, %v832
    %v837 = vmul.f32 %v825, %v836
    %v838 = vpack.c.bf16 %v837, %v837
    %v839 = vld [vmem:[#allocation2 + $0x1c0] sm:$0xf]
    %v840 = vld [vmem:[#allocation2 + $0x1c4] sm:$0xf]
    %v841 = vld [vmem:[#allocation2 + $0x1c8] sm:$0xf]
    %v842 = vld [vmem:[#allocation2 + $0x1cc] sm:$0xf]
    %v843 = vld [vmem:[#allocation2 + $0x1d0] sm:$0xf]
    %v844 = vld [vmem:[#allocation2 + $0x1d4] sm:$0xf]
    %v845 = vld [vmem:[#allocation2 + $0x1d8] sm:$0xf]
    %v846 = vld [vmem:[#allocation2 + $0x1dc] sm:$0xf]
    %v847 = vld [vmem:[#allocation2 + $0x1e0] sm:$0xf]
    %v848 = vld [vmem:[#allocation2 + $0x1e4] sm:$0xf]
    %v849 = vld [vmem:[#allocation2 + $0x1e8] sm:$0xf]
    %v850 = vld [vmem:[#allocation2 + $0x1ec] sm:$0xf]
    %v851 = vld [vmem:[#allocation2 + $0x1f0] sm:$0xf]
    %v852 = vld [vmem:[#allocation2 + $0x1f4] sm:$0xf]
    %v853 = vld [vmem:[#allocation2 + $0x1f8] sm:$0xf]
    %v854 = vld [vmem:[#allocation2 + $0x1fc] sm:$0xf]
    %v855 = vld [vmem:[%s2 + $0x7] sm:$0x1]
    %v856 = vperm.slane %v855, 0
    %v873 = vunpack.c.l.b16 %v839
    %v874 = vunpack.c.l.b16 %v840
    %v875 = vunpack.c.l.b16 %v841
    %v876 = vunpack.c.l.b16 %v842
    %v877 = vunpack.c.l.b16 %v843
    %v878 = vunpack.c.l.b16 %v844
    %v879 = vunpack.c.l.b16 %v845
    %v880 = vunpack.c.l.b16 %v846
    %v881 = vunpack.c.l.b16 %v847
    %v882 = vunpack.c.l.b16 %v848
    %v883 = vunpack.c.l.b16 %v849
    %v884 = vunpack.c.l.b16 %v850
    %v885 = vunpack.c.l.b16 %v851
    %v886 = vunpack.c.l.b16 %v852
    %v887 = vunpack.c.l.b16 %v853
    %v888 = vunpack.c.l.b16 %v854
    %v889 = vpack.c.b16 %v874, %v873
    %v890 = vpack.c.b16 %v876, %v875
    %v891 = vpack.c.b16 %v878, %v877
    %v892 = vpack.c.b16 %v880, %v879
    %v893 = vpack.c.b16 %v882, %v881
    %v894 = vpack.c.b16 %v884, %v883
    %v895 = vpack.c.b16 %v886, %v885
    %v896 = vpack.c.b16 %v888, %v887
    %905 = vmatpush.bf16.msra.mxu0 %v896
    %906 = vmatpush.bf16.msra.mxu0 %v895
    %907 = vmatpush.bf16.msra.mxu0 %v894
    %908 = vmatpush.bf16.msra.mxu0 %v893
    %909 = vmatpush.bf16.msra.mxu0 %v892
    %910 = vmatpush.bf16.msra.mxu0 %v891
    %911 = vmatpush.bf16.msra.mxu0 %v890
    %912 = vmatpush.bf16.msra.mxu0 %v889
    %913 = vmatmul.bf16.gmra.mxu0 %v838
    %v914 = vpop.f32.mrf.mxu0
    %v915 = vadd.f32 %v856, %v914
    %v916 = vpop.f32.mrf.mxu0
    %917 = vdwg.mxu0
    %v918 = vmax.f32 %v915, 0.0
    %v919 = vpack.c.bf16 %v918, %v918
    %v920 = vld [vmem:[#allocation2 + $0x200] sm:$0xf]
    %v921 = vld [vmem:[#allocation2 + $0x204] sm:$0xf]
    %v922 = vld [vmem:[#allocation2 + $0x208] sm:$0xf]
    %v923 = vld [vmem:[#allocation2 + $0x20c] sm:$0xf]
    %v924 = vld [vmem:[#allocation2 + $0x210] sm:$0xf]
    %v925 = vld [vmem:[#allocation2 + $0x214] sm:$0xf]
    %v926 = vld [vmem:[#allocation2 + $0x218] sm:$0xf]
    %v927 = vld [vmem:[#allocation2 + $0x21c] sm:$0xf]
    %v928 = vld [vmem:[#allocation2 + $0x220] sm:$0xf]
    %v929 = vld [vmem:[#allocation2 + $0x224] sm:$0xf]
    %v930 = vld [vmem:[#allocation2 + $0x228] sm:$0xf]
    %v931 = vld [vmem:[#allocation2 + $0x22c] sm:$0xf]
    %v932 = vld [vmem:[#allocation2 + $0x230] sm:$0xf]
    %v933 = vld [vmem:[#allocation2 + $0x234] sm:$0xf]
    %v934 = vld [vmem:[#allocation2 + $0x238] sm:$0xf]
    %v935 = vld [vmem:[#allocation2 + $0x23c] sm:$0xf]
    %v936 = vld [vmem:[%s2 + $0x8] sm:$0x1]
    %v937 = vperm.slane %v936, 0
    %v954 = vunpack.c.l.b16 %v920
    %v955 = vunpack.c.l.b16 %v921
    %v956 = vunpack.c.l.b16 %v922
    %v957 = vunpack.c.l.b16 %v923
    %v958 = vunpack.c.l.b16 %v924
    %v959 = vunpack.c.l.b16 %v925
    %v960 = vunpack.c.l.b16 %v926
    %v961 = vunpack.c.l.b16 %v927
    %v962 = vunpack.c.l.b16 %v928
    %v963 = vunpack.c.l.b16 %v929
    %v964 = vunpack.c.l.b16 %v930
    %v965 = vunpack.c.l.b16 %v931
    %v966 = vunpack.c.l.b16 %v932
    %v967 = vunpack.c.l.b16 %v933
    %v968 = vunpack.c.l.b16 %v934
    %v969 = vunpack.c.l.b16 %v935
    %v970 = vpack.c.b16 %v955, %v954
    %v971 = vpack.c.b16 %v957, %v956
    %v972 = vpack.c.b16 %v959, %v958
    %v973 = vpack.c.b16 %v961, %v960
    %v974 = vpack.c.b16 %v963, %v962
    %v975 = vpack.c.b16 %v965, %v964
    %v976 = vpack.c.b16 %v967, %v966
    %v977 = vpack.c.b16 %v969, %v968
    %986 = vmatpush.bf16.msra.mxu0 %v977
    %987 = vmatpush.bf16.msra.mxu0 %v976
    %988 = vmatpush.bf16.msra.mxu0 %v975
    %989 = vmatpush.bf16.msra.mxu0 %v974
    %990 = vmatpush.bf16.msra.mxu0 %v973
    %991 = vmatpush.bf16.msra.mxu0 %v972
    %992 = vmatpush.bf16.msra.mxu0 %v971
    %993 = vmatpush.bf16.msra.mxu0 %v970
    %994 = vmatmul.bf16.gmra.mxu0 %v919
    %v995 = vpop.f32.mrf.mxu0
    %v996 = vadd.f32 %v937, %v995
    %v997 = vpop.f32.mrf.mxu0
    %998 = vdwg.mxu0
    %v999 = vadd.f32 %v808, %v996
    %v1000 = vmul.f32 %v999, %v999
    %1001 = vrot.lane.b32.xlu0 %v1000, 32
    %v1002 = vpop.permute.xlu0 %1001
    %v1003 = vadd.f32 %v999, %v1002
    %v1004 = vrot.slane %v1003, 4
    %v1005 = vadd.f32 %v1003, %v1004
    %v1006 = vrot.slane %v1005, 2
    %v1007 = vadd.f32 %v1005, %v1006
    %v1008 = vrot.slane %v1007, 1
    %v1009 = vadd.f32 %v1007, %v1008
    %v1010 = vmul.f32 %v1009, %v627
    %1011 = vrot.lane.b32.xlu0 %v1010, 96
    %v1012 = vpop.permute.xlu0 %1011
    %v1013 = vmul.f32 %v1010, %v1010
    %v1014 = vsub.f32 %v1012, %v1013
    %v1015 = vmax.f32 %v1014, 0.0
    %v1016 = vsub.f32 %v999, %v1010
    %v1017 = vadd.f32 %v1015, 1e-05
    %v1018 = vrsqrt.pop %v1017
    %v1019 = vmul.f32 %v1018, %v1017
    %v1020 = vmul.f32 %v1019, %v1018
    %v1021 = vmul.f32 0.5, %v1020
    %v1022 = vsub.f32 1.5, %v1021
    %v1023 = vmul.f32 %v1018, %v1022
    %vm1024 = vweird.f32 %v1017
    %vm1025 = vweird.f32 %v1018
    %vm1026 = vmor %vm1024, %vm1025
    %v1027 = vsel %vm1026, %v1018, %v1023
    %v1028 = vmul.f32 %v1016, %v1027
    %v1029 = vld [vmem:[%s2 + $0x9] sm:$0x1]
    %v1030 = vperm.slane %v1029, 0
    %v1031 = vmul.f32 %v1028, %v1030
    %v1032 = vld [vmem:[%s2 + $0xa] sm:$0x1]
    %v1033 = vperm.slane %v1032, 0
    %v1034 = vadd.f32 %v1031, %v1033
    %v1035 = vmax.f32 %v1034, 0.0
    %v1036 = vpack.c.bf16 %v1035, %v1035
    %v1037 = vld [vmem:[#allocation2 + $0x240] sm:$0xf]
    %v1038 = vld [vmem:[#allocation2 + $0x244] sm:$0xf]
    %v1039 = vld [vmem:[#allocation2 + $0x248] sm:$0xf]
    %v1040 = vld [vmem:[#allocation2 + $0x24c] sm:$0xf]
    %v1041 = vld [vmem:[#allocation2 + $0x250] sm:$0xf]
    %v1042 = vld [vmem:[#allocation2 + $0x254] sm:$0xf]
    %v1043 = vld [vmem:[#allocation2 + $0x258] sm:$0xf]
    %v1044 = vld [vmem:[#allocation2 + $0x25c] sm:$0xf]
    %v1045 = vld [vmem:[#allocation2 + $0x260] sm:$0xf]
    %v1046 = vld [vmem:[#allocation2 + $0x264] sm:$0xf]
    %v1047 = vld [vmem:[#allocation2 + $0x268] sm:$0xf]
    %v1048 = vld [vmem:[#allocation2 + $0x26c] sm:$0xf]
    %v1049 = vld [vmem:[#allocation2 + $0x270] sm:$0xf]
    %v1050 = vld [vmem:[#allocation2 + $0x274] sm:$0xf]
    %v1051 = vld [vmem:[#allocation2 + $0x278] sm:$0xf]
    %v1052 = vld [vmem:[#allocation2 + $0x27c] sm:$0xf]
    %v1053 = vld [vmem:[%s2 + $0xb] sm:$0x1]
    %v1054 = vperm.slane %v1053, 0
    %v1071 = vunpack.c.l.b16 %v1037
    %v1072 = vunpack.c.l.b16 %v1038
    %v1073 = vunpack.c.l.b16 %v1039
    %v1074 = vunpack.c.l.b16 %v1040
    %v1075 = vunpack.c.l.b16 %v1041
    %v1076 = vunpack.c.l.b16 %v1042
    %v1077 = vunpack.c.l.b16 %v1043
    %v1078 = vunpack.c.l.b16 %v1044
    %v1079 = vunpack.c.l.b16 %v1045
    %v1080 = vunpack.c.l.b16 %v1046
    %v1081 = vunpack.c.l.b16 %v1047
    %v1082 = vunpack.c.l.b16 %v1048
    %v1083 = vunpack.c.l.b16 %v1049
    %v1084 = vunpack.c.l.b16 %v1050
    %v1085 = vunpack.c.l.b16 %v1051
    %v1086 = vunpack.c.l.b16 %v1052
    %v1087 = vpack.c.b16 %v1072, %v1071
    %v1088 = vpack.c.b16 %v1074, %v1073
    %v1089 = vpack.c.b16 %v1076, %v1075
    %v1090 = vpack.c.b16 %v1078, %v1077
    %v1091 = vpack.c.b16 %v1080, %v1079
    %v1092 = vpack.c.b16 %v1082, %v1081
    %v1093 = vpack.c.b16 %v1084, %v1083
    %v1094 = vpack.c.b16 %v1086, %v1085
    %1103 = vmatpush.bf16.msra.mxu0 %v1094
    %1104 = vmatpush.bf16.msra.mxu0 %v1093
    %1105 = vmatpush.bf16.msra.mxu0 %v1092
    %1106 = vmatpush.bf16.msra.mxu0 %v1091
    %1107 = vmatpush.bf16.msra.mxu0 %v1090
    %1108 = vmatpush.bf16.msra.mxu0 %v1089
    %1109 = vmatpush.bf16.msra.mxu0 %v1088
    %1110 = vmatpush.bf16.msra.mxu0 %v1087
    %1111 = vmatmul.bf16.gmra.mxu0 %v1036
    %v1112 = vpop.f32.mrf.mxu0
    %v1113 = vadd.f32 %v1054, %v1112
    %v1114 = vpop.f32.mrf.mxu0
    %1115 = vdwg.mxu0
    %1116 = vst [vmem:[#allocation5] sm:$0xff] %v1113
    // Predicated region
    $region18: #{resnet_diffusion_forward.1} parent=1 // pred_check
      _
    $region19: #{resnet_diffusion_forward.1} parent=1 // pred_check_branch
      %1118 = sbr.rel (0) target = $region21
    $region20: #{resnet_diffusion_forward.1} parent=1 // pred_region
      %1120 = vsyncadd [#allocation4], 0
      %s1122 = sshll.u32 [#allocation5], 4
      %s1123 = int_to_ptr.vmem [resolvable:$true] %s1122
      %s1124 = sshll.u32 %s3, 4
      %s1125 = int_to_ptr.hbm [resolvable:$true] %s1124
      %1127 = dma.vmem_to_hbm [thread:$0]  %s1123, 128, %s1125, [#allocation4]
    $region21: #{resnet_diffusion_forward.1} parent=1 // pred_fallthru
      _
    // Predicated region
    $region22: #{resnet_diffusion_forward.1} parent=1 // pred_check
      _
    $region23: #{resnet_diffusion_forward.1} parent=1 // pred_check_branch
      %1129 = sbr.rel (0) target = $region25
    $region24: #{resnet_diffusion_forward.1} parent=1 // pred_region
      %1131 = dma.done [#allocation4], 128
    $region25: #{resnet_diffusion_forward.1} parent=1 // pred_fallthru
      _
    %1132 = vsyncpa [#allocation3], 1
    %1133 = vsyncpa [#allocation4], 1

</llo_original>
